<compile_context>
chip_gen: v6e
topology: v6e:2x2x1
jax: 0.10.0
libtpu: 0.0.40
codegen_flags: <defaults>
</compile_context>

<pallas_src>
import functools

import jax
import jax.numpy as jnp
from jax import lax
from jax.experimental import pallas as pl
from jax.experimental.pallas import tpu as pltpu

NEG_SLOPE = 0.01  # nn.LeakyReLU() default


def _round_up(v, m):
    return ((v + m - 1) // m) * m


# ----------------------------------------------------------------------------
# Pallas kernel: one batch-block (BT batches folded into the lane axis) per step
# ----------------------------------------------------------------------------
def _semi_global_kernel(x_ref, w1_ref, b1_ref, w2_ref, b2_ref, o_ref, *,
                        S, C_MID, C_OUT, K, P, PM, Q_LO, NQ, PH, LSEG, LP, N):
    f32 = jnp.float32

    def lane_roll(v, shift):
        s = shift % N                    # static python int; 0 => identity
        return v if s == 0 else pltpu.roll(v, shift=s, axis=1)

    def leaky(v):
        return jnp.maximum(v, NEG_SLOPE * v)

    x = x_ref[...].astype(f32)                                   # (S*C_in, N)

    # 0/1 mask of valid pooled lanes: [PM, PM + LP) within every LSEG segment.
    rel = lax.broadcasted_iota(jnp.int32, (1, N), 1) % LSEG
    mask = jnp.logical_and(rel >= PM, rel < PM + LP).astype(f32)  # (1, N)

    # ---- contract_conv + LeakyReLU: one MXU contraction over stacked rolls ----
    x_stack = jnp.concatenate(
        [lane_roll(x, -(Q_LO + t)) for t in range(NQ)], axis=0)   # (NQ*S*C_in, N)
    y1 = jnp.dot(w1_ref[...], x_stack, preferred_element_type=f32)
    y1 = leaky(y1 + b1_ref[...])                                  # (S*C_mid, N)

    # ---- contract_pool: MaxPool1d(S, S) == max over the S phase row blocks ----
    pooled = y1[0:C_MID, :]
    for s in range(1, S):
        pooled = jnp.maximum(pooled, y1[s * C_MID:(s + 1) * C_MID, :])
    pooled = pooled * mask                                        # zero outside [0, Lp)

    # ---- expand_conv + LeakyReLU: one MXU contraction over stacked rolls ----
    p_stack = jnp.concatenate(
        [lane_roll(pooled, P - k) for k in range(K)], axis=0)     # (K*C_mid, N)
    y2 = jnp.dot(w2_ref[...], p_stack, preferred_element_type=f32)
    y2 = leaky(y2 + b2_ref[...]) * mask                           # (C_out, N)

    # ---- nearest Upsample(S) + centering pad + residual, one full-ref store ----
    if PH > 0:
        y2s = lane_roll(y2, 1)                                    # phases left of pad
        contrib = jnp.concatenate([y2s] * PH + [y2] * (S - PH), axis=0)
    else:
        contrib = jnp.concatenate([y2] * S, axis=0)               # (S*C_out, N)
    o_ref[...] = (x + contrib).astype(o_ref.dtype)


# ----------------------------------------------------------------------------
# Wrapper: layout plumbing (polyphase reshape, batch folding) + pallas_call
# ----------------------------------------------------------------------------
@functools.partial(jax.jit, static_argnames=("sample_scale", "kernel_size"))
def semi_global_block(x, w1, b1, w2, b2, *, sample_scale=2, kernel_size=5):
    """x: (B, C_in, L); w1: (C_mid, C_in, K); b1: (C_mid,);
    w2: (C_out, C_mid, K); b2: (C_out,)."""
    B, C_in, L = x.shape
    C_mid, _, K = w1.shape
    C_out = w2.shape[0]
    assert K == kernel_size
    assert C_out == C_in, "residual add requires in_channels == out_channels"
    S = sample_scale
    P = K // 2

    Lp = L // S                          # MaxPool1d(S, S) output length
    pad_total = L - Lp * S
    # torch F.pad((pad//2, pad//2)) + torch.add only works when pad_total is even
    assert pad_total % 2 == 0, "module requires L - (L//S)*S to be even"
    PH = pad_total // 2

    # polyphase geometry
    Li = -(-L // S)                      # ceil(L/S) polyphase indices hold data
    Q_LO = -((P + S - 1) // S)           # contract_conv lane-roll range
    Q_HI = (S - 1 + K - 1 - P) // S
    NQ = Q_HI - Q_LO + 1
    PM = max(P, -Q_LO, Q_HI, 1)          # zero margin per batch segment
    LSEG = _round_up(Li + 2 * PM, 128)   # lane-dense per-batch segment length

    # batch folding: fat grid steps (~32K lanes) within a v7x-safe VMEM budget
    words_per_lane = (3 * S * C_in            # x block (double-buffered) + f32 copy
                      + 2 * S * C_out         # out block (double-buffered)
                      + NQ * S * C_in         # x_stack
                      + S * C_mid             # y1
                      + (K + 1) * C_mid       # pooled + p_stack
                      + (S + 2) * C_out)      # y2 + contrib + slack
    budget = 40 * 2**20                       # fits v7x's 64 MiB physical VMEM
    max_lanes = max(LSEG, (budget // (4 * words_per_lane)) // 128 * 128)
    target_lanes = min(32768, max_lanes)
    BT = max(1, min(B, max(1, target_lanes // LSEG)))
    if BT >= B and B > 1 and B * LSEG >= 16384:
        BT = -(-B // 2)                  # keep >= 2 grid steps for v7x megacore
    NB = -(-B // BT)
    Bp = NB * BT
    N = BT * LSEG
    vmem_limit = int(min(56 * 2**20,
                         max(32 * 2**20, 4 * words_per_lane * N * 5 // 4)))

    f32 = jnp.float32
    # de-interleave + fold batches (single transpose):
    #   x[b, c, i*S + s] -> row s*C_in + c, lane (b % BT)*LSEG + PM + i
    xp = jnp.pad(x, ((0, Bp - B), (0, 0), (0, S * Li - L)))
    xp = xp.reshape(NB, BT, C_in, Li, S)
    xp = jnp.pad(xp, ((0, 0), (0, 0), (0, 0), (PM, LSEG - Li - PM), (0, 0)))
    x_blk = jnp.transpose(xp, (0, 4, 2, 1, 3)).reshape(NB, S * C_in, N)

    # flattened polyphase weight for contract_conv: (S*C_mid, NQ*S*C_in)
    w1f = w1.astype(f32)
    w1h = jnp.zeros((NQ, S * C_mid, S * C_in), f32)
    for s in range(S):
        for k in range(K):
            d = s + k - P
            q, sp = d // S, d % S
            w1h = w1h.at[q - Q_LO,
                         s * C_mid:(s + 1) * C_mid,
                         sp * C_in:(sp + 1) * C_in].add(w1f[:, :, k])
    w1_flat = jnp.transpose(w1h, (1, 0, 2)).reshape(S * C_mid, NQ * S * C_in)
    b1r = jnp.tile(b1.astype(f32).reshape(C_mid, 1), (S, 1))      # (S*C_mid, 1)
    # flattened weight for expand_conv: (C_out, K*C_mid)
    w2_flat = jnp.transpose(w2.astype(f32), (0, 2, 1)).reshape(C_out, K * C_mid)
    b2r = b2.astype(f32).reshape(C_out, 1)

    kernel = functools.partial(
        _semi_global_kernel, S=S, C_MID=C_mid, C_OUT=C_out, K=K, P=P,
        PM=PM, Q_LO=Q_LO, NQ=NQ, PH=PH, LSEG=LSEG, LP=Lp, N=N)

    full = lambda shp: pl.BlockSpec(shp, lambda g: (0,) * len(shp))

    out_blk = pl.pallas_call(
        kernel,
        out_shape=jax.ShapeDtypeStruct((NB, S * C_out, N), x.dtype),
        grid_spec=pltpu.PrefetchScalarGridSpec(
            num_scalar_prefetch=0,
            grid=(NB,),
            in_specs=[
                pl.BlockSpec((pl.Squeezed(), S * C_in, N), lambda g: (g, 0, 0)),
                full((S * C_mid, NQ * S * C_in)),
                full((S * C_mid, 1)),
                full((C_out, K * C_mid)),
                full((C_out, 1)),
            ],
            out_specs=pl.BlockSpec((pl.Squeezed(), S * C_out, N),
                                   lambda g: (g, 0, 0)),
        ),
        compiler_params=pltpu.CompilerParams(
            dimension_semantics=("parallel",),
            vmem_limit_bytes=vmem_limit),
    )(x_blk, w1_flat, b1r, w2_flat, b2r)

    # undo batch folding + polyphase layout (single transpose)
    y = out_blk.reshape(NB, S, C_out, BT, LSEG)
    y = jnp.transpose(y, (0, 3, 2, 4, 1))[:, :, :, PM:PM + Li, :]
    y = y.reshape(Bp, C_out, S * Li)
    return y[:B, :, :L]


# ----------------------------------------------------------------------------
# Pure-JAX reference (mirrors the PyTorch forward exactly)
# ----------------------------------------------------------------------------
def semi_global_block_ref(x, w1, b1, w2, b2, *, sample_scale=2, kernel_size=5):
    P = kernel_size // 2
    S = sample_scale

    def leaky(v):
        return jnp.where(v > 0, v, NEG_SLOPE * v)

    def conv1d(v, w, b):
        y = lax.conv_general_dilated(
            v, w, window_strides=(1,), padding=((P, P),),
            dimension_numbers=("NCH", "OIH", "NCH"))
        return y + b[None, :, None]

    y = leaky(conv1d(x, w1, b1))
    y = lax.reduce_window(y, -jnp.inf, lax.max, (1, 1, S), (1, 1, S), "VALID")
    y = leaky(conv1d(y, w2, b2))
    y = jnp.repeat(y, S, axis=-1)                       # nearest upsample
    pad_total = max(0, x.shape[-1] - y.shape[-1])
    ph = pad_total // 2
    y = jnp.pad(y, ((0, 0), (0, 0), (ph, ph)))
    return x + y


# ----------------------------------------------------------------------------
if __name__ == "__main__":
    def run_case(B, C, L, sample_scale, kernel_size):
        feat_scale = max(1, sample_scale // 10)
        C_mid = feat_scale * C
        key = jax.random.PRNGKey(0)
        kx, k1, k2, k3, k4 = jax.random.split(key, 5)
        x = jax.random.normal(kx, (B, C, L), dtype=jnp.float32)
        # Conv1d weight shapes: (out_channels, in_channels, K).
        w1 = 0.2 * jax.random.normal(k1, (C_mid, C, kernel_size), dtype=jnp.float32)
        b1 = 0.1 * jax.random.normal(k2, (C_mid,), dtype=jnp.float32)
        w2 = 0.2 * jax.random.normal(k3, (C, C_mid, kernel_size), dtype=jnp.float32)
        b2 = 0.1 * jax.random.normal(k4, (C,), dtype=jnp.float32)

        out = semi_global_block(x, w1, b1, w2, b2,
                                sample_scale=sample_scale, kernel_size=kernel_size)
        out = jax.block_until_ready(out)
        ref = semi_global_block_ref(x, w1, b1, w2, b2,
                                    sample_scale=sample_scale, kernel_size=kernel_size)
        assert out.shape == (B, C, L)
        err = float(jnp.max(jnp.abs(out - ref)))
        assert err < 1e-4, f"case {(B, C, L, sample_scale)}: max abs err {err}"

    # SemiGlobalBlock(in=4, out=4, sample_scale=2): no centering pad (PH == 0)
    run_case(B=2, C=4, L=16, sample_scale=2, kernel_size=5)
    # SemiGlobalBlock(in=4, out=4, sample_scale=4): L % S == 2 -> centering pad (PH == 1)
    run_case(B=2, C=4, L=18, sample_scale=4, kernel_size=5)

    print("KERNEL_OK")
</pallas_src>

<mosaic_0001>
module attributes {stable_mosaic.version = 11 : i64} {
  func.func @_semi_global_kernel(%arg0: i32, %arg1: memref<1x8x256xf32, #tpu.memory_space<vmem>>, %arg2: memref<8x24xf32, #tpu.memory_space<vmem>>, %arg3: memref<8x1xf32, #tpu.memory_space<vmem>>, %arg4: memref<4x20xf32, #tpu.memory_space<vmem>>, %arg5: memref<4x1xf32, #tpu.memory_space<vmem>>, %arg6: memref<1x8x256xf32, #tpu.memory_space<vmem>>) attributes {dimension_semantics = [#tpu.dimension_semantics<parallel>], iteration_bounds = array<i64: 1>, scalar_prefetch = 0 : i64, scratch_operands = 0 : i64, tpu.core_type = #tpu.core_type<tc>, window_params = [{transform_indices = @transform_0, window_bounds = array<i64: 1, 8, 256>}, {pipeline_mode = #tpu.pipeline_mode<synchronous>, transform_indices = @transform_1, window_bounds = array<i64: 8, 24>}, {pipeline_mode = #tpu.pipeline_mode<synchronous>, transform_indices = @transform_2, window_bounds = array<i64: 8, 1>}, {pipeline_mode = #tpu.pipeline_mode<synchronous>, transform_indices = @transform_3, window_bounds = array<i64: 4, 20>}, {pipeline_mode = #tpu.pipeline_mode<synchronous>, transform_indices = @transform_4, window_bounds = array<i64: 4, 1>}, {transform_indices = @transform_5, window_bounds = array<i64: 1, 8, 256>}]} {
    %c0 = arith.constant 0 : index
    %c0_0 = arith.constant 0 : index
    %c0_1 = arith.constant 0 : index
    %0 = vector.load %arg1[%c0, %c0_0, %c0_1] : memref<1x8x256xf32, #tpu.memory_space<vmem>>, vector<1x8x256xf32>
    %1 = vector.shape_cast %0 : vector<1x8x256xf32> to vector<8x256xf32>
    %2 = tpu.iota {dimensions = array<i32: 1>} : vector<1x256xi32>
    %c128_i32 = arith.constant 128 : i32
    %c0_i32 = arith.constant 0 : i32
    %3 = arith.cmpi eq, %c128_i32, %c0_i32 : i32
    %c1_i32 = arith.constant 1 : i32
    %4 = arith.select %3, %c1_i32, %c128_i32 : i32
    %5 = vector.broadcast %4 : i32 to vector<1x256xi32>
    %6 = arith.remsi %2, %5 : vector<1x256xi32>
    %c0_i32_2 = arith.constant 0 : i32
    %7 = vector.broadcast %c0_i32_2 : i32 to vector<1x256xi32>
    %8 = arith.cmpi ne, %6, %7 : vector<1x256xi32>
    %c0_i32_3 = arith.constant 0 : i32
    %9 = vector.broadcast %c0_i32_3 : i32 to vector<1x256xi32>
    %10 = arith.cmpi slt, %6, %9 : vector<1x256xi32>
    %c0_i32_4 = arith.constant 0 : i32
    %11 = arith.cmpi slt, %4, %c0_i32_4 : i32
    %12 = vector.broadcast %11 : i1 to vector<1x256xi1>
    %13 = vector.broadcast %12 : vector<1x256xi1> to vector<1x256xi1>
    %14 = arith.xori %10, %13 : vector<1x256xi1>
    %15 = arith.andi %14, %8 : vector<1x256xi1>
    %16 = vector.broadcast %4 : i32 to vector<1x256xi32>
    %17 = arith.addi %6, %16 : vector<1x256xi32>
    %18 = arith.select %15, %17, %6 : vector<1x256xi1>, vector<1x256xi32>
    %c2_i32 = arith.constant 2 : i32
    %19 = vector.broadcast %c2_i32 : i32 to vector<1x256xi32>
    %20 = arith.cmpi sge, %18, %19 : vector<1x256xi32>
    %c10_i32 = arith.constant 10 : i32
    %21 = vector.broadcast %c10_i32 : i32 to vector<1x256xi32>
    %22 = arith.cmpi slt, %18, %21 : vector<1x256xi32>
    %23 = arith.andi %20, %22 : vector<1x256xi1>
    %24 = arith.extui %23 : vector<1x256xi1> to vector<1x256xi32>
    %25 = arith.sitofp %24 : vector<1x256xi32> to vector<1x256xf32>
    %c1_i32_5 = arith.constant 1 : i32
    %26 = tpu.dynamic_rotate %1 by %c1_i32_5 dim 1 : vector<8x256xf32>, i32 -> vector<8x256xf32>
    %c255_i32 = arith.constant 255 : i32
    %27 = tpu.dynamic_rotate %1 by %c255_i32 dim 1 : vector<8x256xf32>, i32 -> vector<8x256xf32>
    %28 = tpu.concatenate %26, %1, %27 in 0 : vector<8x256xf32>, vector<8x256xf32>, vector<8x256xf32> -> vector<24x256xf32>
    %c0_6 = arith.constant 0 : index
    %c0_7 = arith.constant 0 : index
    %29 = vector.load %arg2[%c0_6, %c0_7] : memref<8x24xf32, #tpu.memory_space<vmem>>, vector<8x24xf32>
    %cst = arith.constant dense<0.000000e+00> : vector<8x256xf32>
    %30 = tpu.matmul %29, %28, %cst {dimension_numbers = #tpu.dot_dimension_numbers<[1], [0], [0], [1], [0, 0, 1, 1], [], []>} : vector<8x24xf32>, vector<24x256xf32>, vector<8x256xf32> -> vector<8x256xf32>
    %c0_8 = arith.constant 0 : index
    %c0_9 = arith.constant 0 : index
    %31 = vector.load %arg3[%c0_8, %c0_9] : memref<8x1xf32, #tpu.memory_space<vmem>>, vector<8x1xf32>
    %32 = vector.broadcast %31 : vector<8x1xf32> to vector<8x256xf32>
    %33 = arith.addf %30, %32 : vector<8x256xf32>
    %cst_10 = arith.constant 0.00999999977 : f32
    %34 = vector.broadcast %cst_10 : f32 to vector<8x256xf32>
    %35 = arith.mulf %34, %33 : vector<8x256xf32>
    %36 = arith.maximumf %33, %35 : vector<8x256xf32>
    %37 = vector.extract_strided_slice %36 {offsets = [0, 0], sizes = [4, 256], strides = [1, 1]} : vector<8x256xf32> to vector<4x256xf32>
    %38 = vector.extract_strided_slice %36 {offsets = [4, 0], sizes = [4, 256], strides = [1, 1]} : vector<8x256xf32> to vector<4x256xf32>
    %39 = arith.maximumf %37, %38 : vector<4x256xf32>
    %40 = vector.broadcast %25 : vector<1x256xf32> to vector<4x256xf32>
    %41 = arith.mulf %39, %40 : vector<4x256xf32>
    %c2_i32_11 = arith.constant 2 : i32
    %42 = tpu.dynamic_rotate %41 by %c2_i32_11 dim 1 : vector<4x256xf32>, i32 -> vector<4x256xf32>
    %c1_i32_12 = arith.constant 1 : i32
    %43 = tpu.dynamic_rotate %41 by %c1_i32_12 dim 1 : vector<4x256xf32>, i32 -> vector<4x256xf32>
    %c255_i32_13 = arith.constant 255 : i32
    %44 = tpu.dynamic_rotate %41 by %c255_i32_13 dim 1 : vector<4x256xf32>, i32 -> vector<4x256xf32>
    %c254_i32 = arith.constant 254 : i32
    %45 = tpu.dynamic_rotate %41 by %c254_i32 dim 1 : vector<4x256xf32>, i32 -> vector<4x256xf32>
    %46 = tpu.concatenate %42, %43, %41, %44, %45 in 0 : vector<4x256xf32>, vector<4x256xf32>, vector<4x256xf32>, vector<4x256xf32>, vector<4x256xf32> -> vector<20x256xf32>
    %c0_14 = arith.constant 0 : index
    %c0_15 = arith.constant 0 : index
    %47 = vector.load %arg4[%c0_14, %c0_15] : memref<4x20xf32, #tpu.memory_space<vmem>>, vector<4x20xf32>
    %cst_16 = arith.constant dense<0.000000e+00> : vector<4x256xf32>
    %48 = tpu.matmul %47, %46, %cst_16 {dimension_numbers = #tpu.dot_dimension_numbers<[1], [0], [0], [1], [0, 0, 1, 1], [], []>} : vector<4x20xf32>, vector<20x256xf32>, vector<4x256xf32> -> vector<4x256xf32>
    %c0_17 = arith.constant 0 : index
    %c0_18 = arith.constant 0 : index
    %49 = vector.load %arg5[%c0_17, %c0_18] : memref<4x1xf32, #tpu.memory_space<vmem>>, vector<4x1xf32>
    %50 = vector.broadcast %49 : vector<4x1xf32> to vector<4x256xf32>
    %51 = arith.addf %48, %50 : vector<4x256xf32>
    %cst_19 = arith.constant 0.00999999977 : f32
    %52 = vector.broadcast %cst_19 : f32 to vector<4x256xf32>
    %53 = arith.mulf %52, %51 : vector<4x256xf32>
    %54 = arith.maximumf %51, %53 : vector<4x256xf32>
    %55 = vector.broadcast %25 : vector<1x256xf32> to vector<4x256xf32>
    %56 = arith.mulf %54, %55 : vector<4x256xf32>
    %57 = tpu.concatenate %56, %56 in 0 : vector<4x256xf32>, vector<4x256xf32> -> vector<8x256xf32>
    %58 = arith.addf %1, %57 : vector<8x256xf32>
    %c0_20 = arith.constant 0 : index
    %c0_21 = arith.constant 0 : index
    %c0_22 = arith.constant 0 : index
    %59 = vector.load %arg6[%c0_20, %c0_21, %c0_22] : memref<1x8x256xf32, #tpu.memory_space<vmem>>, vector<1x8x256xf32>
    %60 = vector.shape_cast %59 : vector<1x8x256xf32> to vector<8x256xf32>
    %61 = vector.shape_cast %58 : vector<8x256xf32> to vector<1x8x256xf32>
    tpu.vector_store %arg6[%c0_20, %c0_21, %c0_22], %61 {strides = array<i32>} : memref<1x8x256xf32, #tpu.memory_space<vmem>>, vector<1x8x256xf32>,
    return
  }
  func.func @transform_0(%arg0: i32) -> (i32, i32, i32) {
    %c0_i32 = arith.constant 0 : i32
    %c0_i32_0 = arith.constant 0 : i32
    %c0_i32_1 = arith.constant 0 : i32
    return %arg0, %c0_i32, %c0_i32_0 : i32, i32, i32
  }
  func.func @transform_1(%arg0: i32) -> (i32, i32) {
    %c0_i32 = arith.constant 0 : i32
    %c0_i32_0 = arith.constant 0 : i32
    %c0_i32_1 = arith.constant 0 : i32
    return %c0_i32, %c0_i32_0 : i32, i32
  }
  func.func @transform_2(%arg0: i32) -> (i32, i32) {
    %c0_i32 = arith.constant 0 : i32
    %c0_i32_0 = arith.constant 0 : i32
    %c0_i32_1 = arith.constant 0 : i32
    return %c0_i32, %c0_i32_0 : i32, i32
  }
  func.func @transform_3(%arg0: i32) -> (i32, i32) {
    %c0_i32 = arith.constant 0 : i32
    %c0_i32_0 = arith.constant 0 : i32
    %c0_i32_1 = arith.constant 0 : i32
    return %c0_i32, %c0_i32_0 : i32, i32
  }
  func.func @transform_4(%arg0: i32) -> (i32, i32) {
    %c0_i32 = arith.constant 0 : i32
    %c0_i32_0 = arith.constant 0 : i32
    %c0_i32_1 = arith.constant 0 : i32
    return %c0_i32, %c0_i32_0 : i32, i32
  }
  func.func @transform_5(%arg0: i32) -> (i32, i32, i32) {
    %c0_i32 = arith.constant 0 : i32
    %c0_i32_0 = arith.constant 0 : i32
    %c0_i32_1 = arith.constant 0 : i32
    return %arg0, %c0_i32, %c0_i32_0 : i32, i32, i32
  }
}

</mosaic_0001>

<llo_original>
// kernel: semi_global_block.1
$region0: #{semi_global_block.1}
  #allocation0 [shape = 'u32[]', space=smem, size = 0x4, offset = 0x4, fixed_abs, tag = 'smem constant byte address 0x4 - core index']
  #allocation1 [shape = 'u32[144,128]{1,0:T(1,128)}', space=vmem, size = 0x12000, scoped, tag = 'internal scratch']
  %s0 = inlined_call_operand.vmem [shape: f32[1,8,256], index: 0, kind: input, shape index: {}]
  %s1 = inlined_call_operand.vmem [shape: f32[8,24], index: 1, kind: input, shape index: {}]
  %s2 = inlined_call_operand.vmem [shape: f32[8,1], index: 2, kind: input, shape index: {}]
  %s3 = inlined_call_operand.vmem [shape: f32[4,20], index: 3, kind: input, shape index: {}]
  %s4 = inlined_call_operand.vmem [shape: f32[4,1], index: 4, kind: input, shape index: {}]
  %s5 = inlined_call_operand.vmem [shape: f32[1,8,256], index: 5, kind: output, shape index: {}]
  %s6 = sld [smem:[#allocation0]]
  $region30: #{semi_global_block.1} parent=0
    _
  %s8 = ssub.s32 1, %s6
  %s9 = scalar_select 0, %s8, %s6
  // Predicated region
  $region2: #{semi_global_block.1} parent=0 // pred_check
    _
  $region3: #{semi_global_block.1} parent=0 // pred_check_branch
    %11 = sbr.rel (0) target = $region5
  $region4: #{semi_global_block.1} parent=0 // pred_region
    _
  $region5: #{semi_global_block.1} parent=0 // pred_fallthru
    _
  // Predicated region
  $region6: #{semi_global_block.1} parent=0 // pred_check
    _
  $region7: #{semi_global_block.1} parent=0 // pred_check_branch
    %13 = sbr.rel (0) target = $region9
  $region8: #{semi_global_block.1} parent=0 // pred_region
    _
  $region9: #{semi_global_block.1} parent=0 // pred_fallthru
    _
  // Predicated region
  $region10: #{semi_global_block.1} parent=0 // pred_check
    _
  $region11: #{semi_global_block.1} parent=0 // pred_check_branch
    %15 = sbr.rel (0) target = $region13
  $region12: #{semi_global_block.1} parent=0 // pred_region
    _
  $region13: #{semi_global_block.1} parent=0 // pred_fallthru
    _
  // Predicated region
  $region14: #{semi_global_block.1} parent=0 // pred_check
    _
  $region15: #{semi_global_block.1} parent=0 // pred_check_branch
    %17 = sbr.rel (0) target = $region17
  $region16: #{semi_global_block.1} parent=0 // pred_region
    _
  $region17: #{semi_global_block.1} parent=0 // pred_fallthru
    _
  // Predicated region
  $region18: #{semi_global_block.1} parent=0 // pred_check
    _
  $region19: #{semi_global_block.1} parent=0 // pred_check_branch
    %19 = sbr.rel (0) target = $region21
  $region20: #{semi_global_block.1} parent=0 // pred_region
    _
  $region21: #{semi_global_block.1} parent=0 // pred_fallthru
    _
  %v20 = vld [vmem:[%s0] sm:$0xff]
  %v21 = vld [vmem:[%s0 + $0x8] sm:$0xff]
  %v22 = vlaneseq
  %v23 = vand.u32 %v22, 127
  %v24 = vadd.s32 %v23, 128
  %vm25 = vcmp.lt.s32.totalorder %v23, 0
  %v26 = vsub.s32 0, %v23
  %v27 = vsel %vm25, %v26, %v23
  %v28 = vshrl.u32 %v27, 7
  %v29 = vand.u32 %v27, 127
  %v30 = vsub.s32 0, %v29
  %v31 = vsel %vm25, %v30, %v29
  %vm32 = vcmp.lt.s32.totalorder %v24, 0
  %v33 = vsub.s32 0, %v24
  %v34 = vsel %vm32, %v33, %v24
  %v35 = vshrl.u32 %v34, 7
  %v36 = vand.u32 %v34, 127
  %v37 = vsub.s32 0, %v36
  %v38 = vsel %vm32, %v37, %v36
  %vm39 = vcmp.ne.s32.totalorder %v31, 0
  %vm40 = vcmp.ne.s32.totalorder %v38, 0
  %vm41 = vcmp.lt.s32.totalorder %v31, 0
  %vm42 = vcmp.lt.s32.totalorder %v38, 0
  %vm43 = vmand %vm41, %vm39
  %vm44 = vmand %vm42, %vm40
  %v45 = vadd.s32 %v31, 128
  %v46 = vadd.s32 %v38, 128
  %v47 = vsel %vm43, %v45, %v31
  %v48 = vsel %vm44, %v46, %v38
  %vm49 = vcmp.ge.s32.totalorder %v47, 2
  %vm50 = vcmp.ge.s32.totalorder %v48, 2
  %vm51 = vcmp.lt.s32.totalorder %v47, 10
  %vm52 = vcmp.lt.s32.totalorder %v48, 10
  %vm53 = vmand %vm49, %vm51
  %vm54 = vmand %vm50, %vm52
  %v55 = vsel %vm53, 1, 0
  %v56 = vsel %vm54, 1, 0
  %v57 = vcvt.s32.f32 %v55
  %v58 = vcvt.s32.f32 %v56
  %59 = vrot.lane.b32.xlu0 %v20, 1
  %v60 = vpop.permute.xlu0 %59
  %61 = vrot.lane.b32.xlu0 %v21, 1
  %v62 = vpop.permute.xlu0 %61
  %vm63 = vcmp.lt.s32.totalorder %v23, 1
  %v64 = vsel %vm63, %v60, %v62
  %v65 = vsel %vm63, %v62, %v60
  %66 = vrot.lane.b32.xlu0 %v20, 127
  %v67 = vpop.permute.xlu0 %66
  %68 = vrot.lane.b32.xlu0 %v21, 127
  %v69 = vpop.permute.xlu0 %68
  %vm70 = vcmp.lt.s32.totalorder %v23, 127
  %v71 = vsel %vm70, %v67, %v69
  %v72 = vsel %vm70, %v69, %v67
  %v73 = vld [vmem:[%s1] sm:$0xff]
  %v74 = vld [vmem:[%s2] sm:$0xff]
  %76 = vset.pattern.permute.xlu0 0
  %77 = vperm.xlu0 %76, %v74
  %v78 = vpop.permute.xlu0 %77
  %vm80 = vcmask 195584
  %v82 = vsel %vm80, %v73, 0
  %84 = vmatprep.subr.mxu0 0.0
  %85 = vmatpush1.msra.mxu0 0.0
  %86 = vmatprep.subr.mxu0 0.0
  %87 = vmatpush1.msra.mxu0 0.0
  %88 = vmatprep.subr.mxu0 0.0
  %89 = vmatpush1.msra.mxu0 0.0
  %90 = vmatprep.subr.mxu0 0.0
  %91 = vmatpush1.msra.mxu0 0.0
  %92 = vmatprep.subr.mxu0 0.0
  %93 = vmatpush1.msra.mxu0 0.0
  %94 = vmatprep.subr.mxu0 0.0
  %95 = vmatpush1.msra.mxu0 0.0
  %96 = vmatprep.subr.mxu0 0.0
  %97 = vmatpush1.msra.mxu0 0.0
  %98 = vmatprep.subr.mxu0 0.0
  %99 = vmatpush1.msra.mxu0 0.0
  %100 = vmatprep.subr.mxu0 0.0
  %101 = vmatpush1.msra.mxu0 0.0
  %102 = vmatprep.subr.mxu0 0.0
  %103 = vmatpush1.msra.mxu0 0.0
  %104 = vmatprep.subr.mxu0 0.0
  %105 = vmatpush1.msra.mxu0 0.0
  %106 = vmatprep.subr.mxu0 0.0
  %107 = vmatpush1.msra.mxu0 0.0
  %108 = vmatprep.subr.mxu0 0.0
  %109 = vmatpush1.msra.mxu0 0.0
  %110 = vmatprep.subr.mxu0 %v72
  %111 = vmatpush1.msra.mxu0 %v71
  %112 = vmatprep.subr.mxu0 %v21
  %113 = vmatpush1.msra.mxu0 %v20
  %114 = vmatprep.subr.mxu0 %v64
  %115 = vmatpush1.msra.mxu0 %v65
  %116 = vmatprep.subr.mxu0 0.0
  %117 = vmatpush2.msra.mxu0 0.0
  %118 = vmatprep.subr.mxu0 0.0
  %119 = vmatpush2.msra.mxu0 0.0
  %120 = vmatprep.subr.mxu0 0.0
  %121 = vmatpush2.msra.mxu0 0.0
  %122 = vmatprep.subr.mxu0 0.0
  %123 = vmatpush2.msra.mxu0 0.0
  %124 = vmatprep.subr.mxu0 0.0
  %125 = vmatpush2.msra.mxu0 0.0
  %126 = vmatprep.subr.mxu0 0.0
  %127 = vmatpush2.msra.mxu0 0.0
  %128 = vmatprep.subr.mxu0 0.0
  %129 = vmatpush2.msra.mxu0 0.0
  %130 = vmatprep.subr.mxu0 0.0
  %131 = vmatpush2.msra.mxu0 0.0
  %132 = vmatprep.subr.mxu0 0.0
  %133 = vmatpush2.msra.mxu0 0.0
  %134 = vmatprep.subr.mxu0 0.0
  %135 = vmatpush2.msra.mxu0 0.0
  %136 = vmatprep.subr.mxu0 0.0
  %137 = vmatpush2.msra.mxu0 0.0
  %138 = vmatprep.subr.mxu0 0.0
  %139 = vmatpush2.msra.mxu0 0.0
  %140 = vmatprep.subr.mxu0 0.0
  %141 = vmatpush2.msra.mxu0 0.0
  %142 = vmatprep.subr.mxu0 0.0
  %143 = vmatpush2.msra.mxu0 0.0
  %144 = vmatprep.subr.mxu0 0.0
  %145 = vmatpush2.msra.mxu0 0.0
  %146 = vmatprep.subr.mxu0 0.0
  %147 = vmatpush2.msra.mxu0 0.0
  %148 = vmatprep.mubr.f32.mxu0 0.0
  %149 = vmatmul.mubr.f32.gmra.mxu0 %v82
  %v150 = vpop.f32.mrf.mxu0
  %v151 = vadd.f32 %v78, %v150
  %v152 = vpop.f32.mrf.mxu0
  %v153 = vadd.f32 %v78, %v152
  %154 = vdwg.mxu0
  %v155 = vmul.f32 %v151, 0.01
  %v156 = vmul.f32 %v153, 0.01
  %v157 = vmax.f32 %v151, %v155
  %v158 = vmax.f32 %v153, %v156
  %v161 = vrot.slane %v157, 4
  %v162 = vrot.slane %v158, 4
  %v165 = vmax.f32 %v157, %v161
  %v166 = vmax.f32 %v158, %v162
  %v167 = vmul.f32 %v165, %v57
  %v168 = vmul.f32 %v166, %v58
  %169 = vrot.lane.b32.xlu0 %v167, 2
  %v170 = vpop.permute.xlu0 %169
  %171 = vrot.lane.b32.xlu0 %v168, 2
  %v172 = vpop.permute.xlu0 %171
  %vm173 = vcmp.lt.s32.totalorder %v23, 2
  %v174 = vsel %vm173, %v170, %v172
  %v175 = vsel %vm173, %v172, %v170
  %176 = vrot.lane.b32.xlu0 %v167, 1
  %v177 = vpop.permute.xlu0 %176
  %178 = vrot.lane.b32.xlu0 %v168, 1
  %v179 = vpop.permute.xlu0 %178
  %v180 = vsel %vm63, %v177, %v179
  %v181 = vsel %vm63, %v179, %v177
  %182 = vrot.lane.b32.xlu0 %v167, 127
  %v183 = vpop.permute.xlu0 %182
  %184 = vrot.lane.b32.xlu0 %v168, 127
  %v185 = vpop.permute.xlu0 %184
  %v186 = vsel %vm70, %v183, %v185
  %v187 = vsel %vm70, %v185, %v183
  %188 = vrot.lane.b32.xlu0 %v167, 126
  %v189 = vpop.permute.xlu0 %188
  %190 = vrot.lane.b32.xlu0 %v168, 126
  %v191 = vpop.permute.xlu0 %190
  %vm192 = vcmp.lt.s32.totalorder %v23, 126
  %v193 = vsel %vm192, %v189, %v191
  %v194 = vsel %vm192, %v191, %v189
  %v197 = vrot.slane %v181, 4
  %v198 = vrot.slane %v180, 4
  %v203 = vrot.slane %v186, 4
  %v204 = vrot.slane %v187, 4
  %vm207 = vcmask 1043456
  %v208 = vsel %vm207, %v175, %v197
  %v209 = vsel %vm207, %v174, %v198
  %v210 = vsel %vm207, %v167, %v203
  %v211 = vsel %vm207, %v168, %v204
  %v212 = vld [vmem:[%s3] sm:$0xf]
  %v213 = vld [vmem:[%s4] sm:$0xf]
  %215 = vset.pattern.permute.xlu0 0
  %216 = vperm.xlu0 %215, %v213
  %v217 = vpop.permute.xlu0 %216
  %vm219 = vcmask 162816
  %v221 = vsel %vm219, %v212, 0
  %v224 = vsel %vm207, %v193, 0
  %v227 = vsel %vm207, %v194, 0
  %229 = vmatprep.subr.mxu0 0.0
  %230 = vmatpush1.msra.mxu0 0.0
  %231 = vmatprep.subr.mxu0 0.0
  %232 = vmatpush1.msra.mxu0 0.0
  %233 = vmatprep.subr.mxu0 0.0
  %234 = vmatpush1.msra.mxu0 0.0
  %235 = vmatprep.subr.mxu0 0.0
  %236 = vmatpush1.msra.mxu0 0.0
  %237 = vmatprep.subr.mxu0 0.0
  %238 = vmatpush1.msra.mxu0 0.0
  %239 = vmatprep.subr.mxu0 0.0
  %240 = vmatpush1.msra.mxu0 0.0
  %241 = vmatprep.subr.mxu0 0.0
  %242 = vmatpush1.msra.mxu0 0.0
  %243 = vmatprep.subr.mxu0 0.0
  %244 = vmatpush1.msra.mxu0 0.0
  %245 = vmatprep.subr.mxu0 0.0
  %246 = vmatpush1.msra.mxu0 0.0
  %247 = vmatprep.subr.mxu0 0.0
  %248 = vmatpush1.msra.mxu0 0.0
  %249 = vmatprep.subr.mxu0 0.0
  %250 = vmatpush1.msra.mxu0 0.0
  %251 = vmatprep.subr.mxu0 0.0
  %252 = vmatpush1.msra.mxu0 0.0
  %253 = vmatprep.subr.mxu0 0.0
  %254 = vmatpush1.msra.mxu0 0.0
  %255 = vmatprep.subr.mxu0 %v227
  %256 = vmatpush1.msra.mxu0 %v224
  %257 = vmatprep.subr.mxu0 %v211
  %258 = vmatpush1.msra.mxu0 %v210
  %259 = vmatprep.subr.mxu0 %v209
  %260 = vmatpush1.msra.mxu0 %v208
  %261 = vmatprep.subr.mxu0 0.0
  %262 = vmatpush2.msra.mxu0 0.0
  %263 = vmatprep.subr.mxu0 0.0
  %264 = vmatpush2.msra.mxu0 0.0
  %265 = vmatprep.subr.mxu0 0.0
  %266 = vmatpush2.msra.mxu0 0.0
  %267 = vmatprep.subr.mxu0 0.0
  %268 = vmatpush2.msra.mxu0 0.0
  %269 = vmatprep.subr.mxu0 0.0
  %270 = vmatpush2.msra.mxu0 0.0
  %271 = vmatprep.subr.mxu0 0.0
  %272 = vmatpush2.msra.mxu0 0.0
  %273 = vmatprep.subr.mxu0 0.0
  %274 = vmatpush2.msra.mxu0 0.0
  %275 = vmatprep.subr.mxu0 0.0
  %276 = vmatpush2.msra.mxu0 0.0
  %277 = vmatprep.subr.mxu0 0.0
  %278 = vmatpush2.msra.mxu0 0.0
  %279 = vmatprep.subr.mxu0 0.0
  %280 = vmatpush2.msra.mxu0 0.0
  %281 = vmatprep.subr.mxu0 0.0
  %282 = vmatpush2.msra.mxu0 0.0
  %283 = vmatprep.subr.mxu0 0.0
  %284 = vmatpush2.msra.mxu0 0.0
  %285 = vmatprep.subr.mxu0 0.0
  %286 = vmatpush2.msra.mxu0 0.0
  %287 = vmatprep.subr.mxu0 0.0
  %288 = vmatpush2.msra.mxu0 0.0
  %289 = vmatprep.subr.mxu0 0.0
  %290 = vmatpush2.msra.mxu0 0.0
  %291 = vmatprep.subr.mxu0 0.0
  %292 = vmatpush2.msra.mxu0 0.0
  %293 = vmatprep.mubr.f32.mxu0 0.0
  %294 = vmatmul.mubr.f32.gmra.mxu0 %v221
  %v295 = vpop.f32.mrf.mxu0
  %v296 = vadd.f32 %v217, %v295
  %v297 = vpop.f32.mrf.mxu0
  %v298 = vadd.f32 %v217, %v297
  %299 = vdwg.mxu0
  %v300 = vmul.f32 %v296, 0.01
  %v301 = vmul.f32 %v298, 0.01
  %v302 = vmax.f32 %v296, %v300
  %v303 = vmax.f32 %v298, %v301
  %v304 = vmul.f32 %v302, %v57
  %v305 = vmul.f32 %v303, %v58
  %v308 = vrot.slane %v304, 4
  %v309 = vrot.slane %v305, 4
  %v312 = vsel %vm207, %v304, %v308
  %v313 = vsel %vm207, %v305, %v309
  %v314 = vadd.f32 %v20, %v312
  %v315 = vadd.f32 %v21, %v313
  %316 = vst [vmem:[%s5] sm:$0xff] %v314
  %317 = vst [vmem:[%s5 + $0x8] sm:$0xff] %v315
  // Predicated region
  $region22: #{semi_global_block.1} parent=0 // pred_check
    _
  $region23: #{semi_global_block.1} parent=0 // pred_check_branch
    %319 = sbr.rel (0) target = $region25
  $region24: #{semi_global_block.1} parent=0 // pred_region
    _
  $region25: #{semi_global_block.1} parent=0 // pred_fallthru
    _
  // Predicated region
  $region26: #{semi_global_block.1} parent=0 // pred_check
    _
  $region27: #{semi_global_block.1} parent=0 // pred_check_branch
    %321 = sbr.rel (0) target = $region29
  $region28: #{semi_global_block.1} parent=0 // pred_region
    _
  $region29: #{semi_global_block.1} parent=0 // pred_fallthru
    _

</llo_original>
